<compile_context>
chip_gen: v5e
topology: v5e:2x2
jax: 0.10.0
libtpu: 0.0.40
codegen_flags: <defaults>
</compile_context>

<pallas_src>
import functools

import jax
import jax.numpy as jnp
from jax.experimental import pallas as pl
from jax.experimental.pallas import tpu as pltpu


LANE = 128      # lane-dense padding granule for feature dims
NODE_TILE = 256 # row / contraction tile over nodes (MXU-friendly on v5e/v6e/v7x)


def _round_up(x, m):
    return (x + m - 1) // m * m


def _pad2d(x, rows, cols):
    pr = rows - x.shape[0]
    pc = cols - x.shape[1]
    if pr == 0 and pc == 0:
        return x
    return jnp.pad(x, ((0, pr), (0, pc)))


def _gcn_layer_kernel(adj_ref, h_ref, w_ref, b_ref, o_ref, acc_ref, *, apply_act):
    """One (row-tile, k-tile) step of  act(A @ (h @ W) + b)."""
    k = pl.program_id(1)

    @pl.when(k == 0)
    def _init():
        acc_ref[...] = jnp.zeros_like(acc_ref)

    # Linear projection of this source-node tile: [tk, F_in] @ [F_in, F_out] (f32 acc).
    hw = jnp.dot(h_ref[...], w_ref[...], preferred_element_type=jnp.float32)
    # Aggregate incoming messages: [tm, tk] @ [tk, F_out], accumulate in f32 scratch.
    acc_ref[...] += jnp.dot(adj_ref[...], hw.astype(adj_ref.dtype),
                            preferred_element_type=jnp.float32)

    @pl.when(k == pl.num_programs(1) - 1)
    def _finish():
        out = acc_ref[...] + b_ref[...]
        if apply_act:
            out = jnp.maximum(out, 0.0)  # ReLU
        o_ref[...] = out.astype(o_ref.dtype)


def _gcn_layer_call(adj_p, h_p, w_p, b_p, *, apply_act=True, tile=NODE_TILE):
    """One GCNLayer on padded inputs.

    adj_p : [N_pad, N_pad]      bf16   (N_pad multiple of `tile`)
    h_p   : [N_pad, F_in_pad]   bf16   (F_in_pad multiple of 128)
    w_p   : [F_in_pad, F_out_pad] bf16 (F_out_pad multiple of 128)
    b_p   : [1, F_out_pad]      f32
    returns [N_pad, F_out_pad]  bf16
    """
    n_pad = adj_p.shape[0]
    f_in_pad = h_p.shape[1]
    f_out_pad = w_p.shape[1]
    tile_m = min(tile, n_pad)
    tile_k = min(tile, n_pad)
    assert n_pad % tile_m == 0 and n_pad % tile_k == 0

    kernel = functools.partial(_gcn_layer_kernel, apply_act=apply_act)
    return pl.pallas_call(
        kernel,
        out_shape=jax.ShapeDtypeStruct((n_pad, f_out_pad), jnp.bfloat16),
        grid_spec=pltpu.PrefetchScalarGridSpec(
            num_scalar_prefetch=0,
            grid=(n_pad // tile_m, n_pad // tile_k),
            in_specs=[
                pl.BlockSpec((tile_m, tile_k), lambda i, k: (i, k)),       # adj tile
                pl.BlockSpec((tile_k, f_in_pad), lambda i, k: (k, 0)),     # h tile
                pl.BlockSpec((f_in_pad, f_out_pad), lambda i, k: (0, 0)),  # W (resident)
                pl.BlockSpec((1, f_out_pad), lambda i, k: (0, 0)),         # b (resident)
            ],
            out_specs=pl.BlockSpec((tile_m, f_out_pad), lambda i, k: (i, 0)),
            scratch_shapes=[pltpu.VMEM((tile_m, f_out_pad), jnp.float32)],
        ),
        compiler_params=pltpu.CompilerParams(
            dimension_semantics=("parallel", "arbitrary")),
    )(adj_p, h_p, w_p, b_p)


def init_gcn_params(key, in_feats, n_hidden, n_classes, n_layers):
    """Deterministic Linear params per layer (Kaiming-uniform-like, as torch)."""
    if n_layers < 2:
        dims = [(in_feats, n_classes)]
    else:
        dims = [(in_feats, n_hidden)]
        dims += [(n_hidden, n_hidden)] * (n_layers - 2)
        dims += [(n_hidden, n_classes)]
    params = []
    for (fi, fo) in dims:
        key, kw, kb = jax.random.split(key, 3)
        bound = 1.0 / jnp.sqrt(jnp.float32(fi))
        w = jax.random.uniform(kw, (fi, fo), jnp.float32, -bound, bound)
        b = jax.random.uniform(kb, (1, fo), jnp.float32, -bound, bound)
        params.append((w, b))
    return params


def gcn_forward(adj, features, params, *, tile=NODE_TILE):
    """GCN.forward: stack of GCNLayers, one fused pallas_call per layer.

    adj[i, j] = weight of edge j -> i (dense weighted adjacency), features [N, F_in].
    Padding/casting is done once here; intermediate activations stay bf16 and
    padded between layers (padded rows/cols are exact zeros where it matters).
    """
    n = adj.shape[0]
    n_classes = params[-1][0].shape[1]
    n_pad = _round_up(n, tile)

    adj_p = _pad2d(adj, n_pad, n_pad).astype(jnp.bfloat16)
    h = _pad2d(features, n_pad, _round_up(features.shape[1], LANE)).astype(jnp.bfloat16)

    for (w, b) in params:
        f_in_pad = h.shape[1]
        f_out_pad = _round_up(w.shape[1], LANE)
        w_p = _pad2d(w, f_in_pad, f_out_pad).astype(jnp.bfloat16)
        b_p = _pad2d(b, 1, f_out_pad).astype(jnp.float32)
        h = _gcn_layer_call(adj_p, h, w_p, b_p, apply_act=True, tile=tile)

    return h[:n, :n_classes].astype(jnp.float32)


def gcn_reference_f32(adj, features, params):
    h = features
    for (w, b) in params:
        h = jnp.maximum((adj @ h) @ w + b, 0.0)
    return h


def gcn_reference_matched(adj, features, params):
    """Same mixed-precision scheme as the kernel (bf16 MXU inputs, f32 accumulation)."""
    a = adj.astype(jnp.bfloat16)
    h = features.astype(jnp.bfloat16)
    for (w, b) in params:
        hw = jnp.dot(h, w.astype(jnp.bfloat16),
                     preferred_element_type=jnp.float32).astype(jnp.bfloat16)
        h = jnp.maximum(jnp.dot(a, hw, preferred_element_type=jnp.float32) + b, 0.0)
        h = h.astype(jnp.bfloat16)
    return h.astype(jnp.float32)


if __name__ == "__main__":
    key = jax.random.PRNGKey(0)

    N_NODES = 8
    IN_FEATS = 16
    N_HIDDEN = 32
    N_CLASSES = 8
    N_LAYERS = 2

    key, k_feat, k_adj, k_param = jax.random.split(key, 4)
    features = jax.random.normal(k_feat, (N_NODES, IN_FEATS), jnp.float32)
    # Dense weighted adjacency (edge weights), A[dst, src]
    adj = jax.random.uniform(k_adj, (N_NODES, N_NODES), jnp.float32, 0.0, 1.0)

    params = init_gcn_params(k_param, IN_FEATS, N_HIDDEN, N_CLASSES, N_LAYERS)

    out = jax.jit(gcn_forward)(adj, features, params)
    out = jax.block_until_ready(out)
    assert out.shape == (N_NODES, N_CLASSES)

    # Tight check against a reference using the exact same mixed-precision scheme.
    ref_matched = gcn_reference_matched(adj, features, params)
    assert jnp.allclose(out, ref_matched, rtol=3e-2, atol=5e-2), \
        "mismatch vs matched-precision reference"

    # Loose check against the pure-f32 reference (tolerance covers bf16 MXU inputs).
    ref_f32 = gcn_reference_f32(adj, features, params)
    assert jnp.allclose(out, ref_f32, rtol=5e-2, atol=2e-1), "mismatch vs f32 reference"

    print("KERNEL_OK")
</pallas_src>

<mosaic_0001>
module attributes {stable_mosaic.version = 11 : i64} {
  func.func @_gcn_layer_kernel(%arg0: i32, %arg1: i32, %arg2: memref<256x256xbf16, #tpu.memory_space<vmem>>, %arg3: memref<256x128xbf16, #tpu.memory_space<vmem>>, %arg4: memref<128x128xbf16, #tpu.memory_space<vmem>>, %arg5: memref<1x128xf32, #tpu.memory_space<vmem>>, %arg6: memref<256x128xbf16, #tpu.memory_space<vmem>>, %arg7: memref<256x128xf32, #tpu.memory_space<vmem>>) attributes {dimension_semantics = [#tpu.dimension_semantics<parallel>, #tpu.dimension_semantics<arbitrary>], iteration_bounds = array<i64: 1, 1>, scalar_prefetch = 0 : i64, scratch_operands = 1 : i64, tpu.core_type = #tpu.core_type<tc>, window_params = [{transform_indices = @transform_0, window_bounds = array<i64: 256, 256>}, {transform_indices = @transform_1, window_bounds = array<i64: 256, 128>}, {pipeline_mode = #tpu.pipeline_mode<synchronous>, transform_indices = @transform_2, window_bounds = array<i64: 128, 128>}, {pipeline_mode = #tpu.pipeline_mode<synchronous>, transform_indices = @transform_3, window_bounds = array<i64: 1, 128>}, {transform_indices = @transform_4, window_bounds = array<i64: 256, 128>}]} {
    %c0_i32 = arith.constant 0 : i32
    %0 = arith.cmpi eq, %arg1, %c0_i32 : i32
    %1 = arith.extui %0 : i1 to i32
    %c0_i32_0 = arith.constant 0 : i32
    %2 = arith.cmpi ne, %1, %c0_i32_0 : i32
    scf.if %2 {
      %cst_13 = arith.constant 0.000000e+00 : f32
      %15 = vector.broadcast %cst_13 : f32 to vector<256x128xf32>
      %c0_14 = arith.constant 0 : index
      %c0_15 = arith.constant 0 : index
      %16 = vector.load %arg7[%c0_14, %c0_15] : memref<256x128xf32, #tpu.memory_space<vmem>>, vector<256x128xf32>
      tpu.vector_store %arg7[%c0_14, %c0_15], %15 {strides = array<i32>} : memref<256x128xf32, #tpu.memory_space<vmem>>, vector<256x128xf32>,
    } else {
    }
    %c0 = arith.constant 0 : index
    %c0_1 = arith.constant 0 : index
    %3 = vector.load %arg3[%c0, %c0_1] : memref<256x128xbf16, #tpu.memory_space<vmem>>, vector<256x128xbf16>
    %c0_2 = arith.constant 0 : index
    %c0_3 = arith.constant 0 : index
    %4 = vector.load %arg4[%c0_2, %c0_3] : memref<128x128xbf16, #tpu.memory_space<vmem>>, vector<128x128xbf16>
    %cst = arith.constant dense<0.000000e+00> : vector<256x128xf32>
    %5 = tpu.matmul %3, %4, %cst {dimension_numbers = #tpu.dot_dimension_numbers<[1], [0], [0], [1], [0, 0, 1, 1], [], []>} : vector<256x128xbf16>, vector<128x128xbf16>, vector<256x128xf32> -> vector<256x128xf32>
    %c0_4 = arith.constant 0 : index
    %c0_5 = arith.constant 0 : index
    %6 = vector.load %arg7[%c0_4, %c0_5] : memref<256x128xf32, #tpu.memory_space<vmem>>, vector<256x128xf32>
    %c0_6 = arith.constant 0 : index
    %c0_7 = arith.constant 0 : index
    %7 = vector.load %arg2[%c0_6, %c0_7] : memref<256x256xbf16, #tpu.memory_space<vmem>>, vector<256x256xbf16>
    %8 = arith.truncf %5 : vector<256x128xf32> to vector<256x128xbf16>
    %cst_8 = arith.constant dense<0.000000e+00> : vector<256x128xf32>
    %9 = tpu.matmul %7, %8, %cst_8 {dimension_numbers = #tpu.dot_dimension_numbers<[1], [0], [0], [1], [0, 0, 1, 1], [], []>} : vector<256x256xbf16>, vector<256x128xbf16>, vector<256x128xf32> -> vector<256x128xf32>
    %10 = arith.addf %6, %9 : vector<256x128xf32>
    %c0_9 = arith.constant 0 : index
    %c0_10 = arith.constant 0 : index
    %11 = vector.load %arg7[%c0_9, %c0_10] : memref<256x128xf32, #tpu.memory_space<vmem>>, vector<256x128xf32>
    tpu.vector_store %arg7[%c0_9, %c0_10], %10 {strides = array<i32>} : memref<256x128xf32, #tpu.memory_space<vmem>>, vector<256x128xf32>,
    %c0_i32_11 = arith.constant 0 : i32
    %12 = arith.cmpi eq, %arg1, %c0_i32_11 : i32
    %13 = arith.extui %12 : i1 to i32
    %c0_i32_12 = arith.constant 0 : i32
    %14 = arith.cmpi ne, %13, %c0_i32_12 : i32
    scf.if %14 {
      %c0_13 = arith.constant 0 : index
      %c0_14 = arith.constant 0 : index
      %15 = vector.load %arg7[%c0_13, %c0_14] : memref<256x128xf32, #tpu.memory_space<vmem>>, vector<256x128xf32>
      %c0_15 = arith.constant 0 : index
      %c0_16 = arith.constant 0 : index
      %16 = vector.load %arg5[%c0_15, %c0_16] : memref<1x128xf32, #tpu.memory_space<vmem>>, vector<1x128xf32>
      %17 = vector.broadcast %16 : vector<1x128xf32> to vector<256x128xf32>
      %18 = arith.addf %15, %17 : vector<256x128xf32>
      %cst_17 = arith.constant 0.000000e+00 : f32
      %19 = vector.broadcast %cst_17 : f32 to vector<256x128xf32>
      %20 = arith.maximumf %18, %19 : vector<256x128xf32>
      %21 = arith.truncf %20 : vector<256x128xf32> to vector<256x128xbf16>
      %c0_18 = arith.constant 0 : index
      %c0_19 = arith.constant 0 : index
      %22 = vector.load %arg6[%c0_18, %c0_19] : memref<256x128xbf16, #tpu.memory_space<vmem>>, vector<256x128xbf16>
      tpu.vector_store %arg6[%c0_18, %c0_19], %21 {strides = array<i32>} : memref<256x128xbf16, #tpu.memory_space<vmem>>, vector<256x128xbf16>,
    } else {
    }
    return
  }
  func.func @transform_0(%arg0: i32, %arg1: i32) -> (i32, i32) {
    %c0_i32 = arith.constant 0 : i32
    return %arg0, %arg1 : i32, i32
  }
  func.func @transform_1(%arg0: i32, %arg1: i32) -> (i32, i32) {
    %c0_i32 = arith.constant 0 : i32
    %c0_i32_0 = arith.constant 0 : i32
    return %arg1, %c0_i32 : i32, i32
  }
  func.func @transform_2(%arg0: i32, %arg1: i32) -> (i32, i32) {
    %c0_i32 = arith.constant 0 : i32
    %c0_i32_0 = arith.constant 0 : i32
    %c0_i32_1 = arith.constant 0 : i32
    return %c0_i32, %c0_i32_0 : i32, i32
  }
  func.func @transform_3(%arg0: i32, %arg1: i32) -> (i32, i32) {
    %c0_i32 = arith.constant 0 : i32
    %c0_i32_0 = arith.constant 0 : i32
    %c0_i32_1 = arith.constant 0 : i32
    return %c0_i32, %c0_i32_0 : i32, i32
  }
  func.func @transform_4(%arg0: i32, %arg1: i32) -> (i32, i32) {
    %c0_i32 = arith.constant 0 : i32
    %c0_i32_0 = arith.constant 0 : i32
    return %arg0, %c0_i32 : i32, i32
  }
}

</mosaic_0001>

<llo_original>
// kernel: gcn_forward.2
$region0: #{gcn_forward.2}
  #allocation0 [shape = 'u32[]', space=smem, size = 0x4, offset = 0x4, fixed_abs, tag = 'smem constant byte address 0x4 - core index']
  #allocation1 [shape = 'u32[72,128]{1,0:T(1,128)}', space=vmem, size = 0x9000, scoped, tag = 'internal scratch']
  #allocation2 [shape = 'f32[256,128]{1,0:T(8,128)}', space=vmem, size = 0x20000, scoped, tag = 'scratch operand']
  %s0 = inlined_call_operand.vmem [shape: bf16[256,256], index: 0, kind: input, shape index: {}]
  %s1 = inlined_call_operand.vmem [shape: bf16[256,128], index: 1, kind: input, shape index: {}]
  %s2 = inlined_call_operand.vmem [shape: bf16[128,128], index: 2, kind: input, shape index: {}]
  %s3 = inlined_call_operand.vmem [shape: f32[1,128], index: 3, kind: input, shape index: {}]
  %s4 = inlined_call_operand.vmem [shape: bf16[256,128], index: 4, kind: output, shape index: {}]
  %s5 = sld [smem:[#allocation0]]
  $region34: #{gcn_forward.2} parent=0
    _
  %s7 = ssub.s32 1, %s5
  %s8 = scalar_select 0, %s7, %s5
  // Predicated region
  $region2: #{gcn_forward.2} parent=0 // pred_check
    _
  $region3: #{gcn_forward.2} parent=0 // pred_check_branch
    %10 = sbr.rel (0) target = $region5
  $region4: #{gcn_forward.2} parent=0 // pred_region
    _
  $region5: #{gcn_forward.2} parent=0 // pred_fallthru
    _
  // Predicated region
  $region6: #{gcn_forward.2} parent=0 // pred_check
    _
  $region7: #{gcn_forward.2} parent=0 // pred_check_branch
    %12 = sbr.rel (0) target = $region9
  $region8: #{gcn_forward.2} parent=0 // pred_region
    _
  $region9: #{gcn_forward.2} parent=0 // pred_fallthru
    _
  // Predicated region
  $region10: #{gcn_forward.2} parent=0 // pred_check
    _
  $region11: #{gcn_forward.2} parent=0 // pred_check_branch
    %14 = sbr.rel (0) target = $region13
  $region12: #{gcn_forward.2} parent=0 // pred_region
    _
  $region13: #{gcn_forward.2} parent=0 // pred_fallthru
    _
  // Predicated region
  $region14: #{gcn_forward.2} parent=0 // pred_check
    _
  $region15: #{gcn_forward.2} parent=0 // pred_check_branch
    %16 = sbr.rel (0) target = $region17
  $region16: #{gcn_forward.2} parent=0 // pred_region
    _
  $region17: #{gcn_forward.2} parent=0 // pred_fallthru
    _
  %p17 = scmp.eq.s32.totalorder 0, 0
  // Predicated region
  $region18: #{gcn_forward.2} parent=0 // pred_check
    %p18 = pneg %p17
  $region19: #{gcn_forward.2} parent=0 // pred_check_branch
    %20 = sbr.rel (%p18) target = $region21
  $region20: #{gcn_forward.2} parent=0 // pred_region
    %21 = vst [vmem:[#allocation2] sm:$0xff] 0.0
    %22 = vst [vmem:[#allocation2 + $0x8] sm:$0xff] 0.0
    %23 = vst [vmem:[#allocation2 + $0x10] sm:$0xff] 0.0
    %24 = vst [vmem:[#allocation2 + $0x18] sm:$0xff] 0.0
    %25 = vst [vmem:[#allocation2 + $0x20] sm:$0xff] 0.0
    %26 = vst [vmem:[#allocation2 + $0x28] sm:$0xff] 0.0
    %27 = vst [vmem:[#allocation2 + $0x30] sm:$0xff] 0.0
    %28 = vst [vmem:[#allocation2 + $0x38] sm:$0xff] 0.0
    %29 = vst [vmem:[#allocation2 + $0x40] sm:$0xff] 0.0
    %30 = vst [vmem:[#allocation2 + $0x48] sm:$0xff] 0.0
    %31 = vst [vmem:[#allocation2 + $0x50] sm:$0xff] 0.0
    %32 = vst [vmem:[#allocation2 + $0x58] sm:$0xff] 0.0
    %33 = vst [vmem:[#allocation2 + $0x60] sm:$0xff] 0.0
    %34 = vst [vmem:[#allocation2 + $0x68] sm:$0xff] 0.0
    %35 = vst [vmem:[#allocation2 + $0x70] sm:$0xff] 0.0
    %36 = vst [vmem:[#allocation2 + $0x78] sm:$0xff] 0.0
    %37 = vst [vmem:[#allocation2 + $0x80] sm:$0xff] 0.0
    %38 = vst [vmem:[#allocation2 + $0x88] sm:$0xff] 0.0
    %39 = vst [vmem:[#allocation2 + $0x90] sm:$0xff] 0.0
    %40 = vst [vmem:[#allocation2 + $0x98] sm:$0xff] 0.0
    %41 = vst [vmem:[#allocation2 + $0xa0] sm:$0xff] 0.0
    %42 = vst [vmem:[#allocation2 + $0xa8] sm:$0xff] 0.0
    %43 = vst [vmem:[#allocation2 + $0xb0] sm:$0xff] 0.0
    %44 = vst [vmem:[#allocation2 + $0xb8] sm:$0xff] 0.0
    %45 = vst [vmem:[#allocation2 + $0xc0] sm:$0xff] 0.0
    %46 = vst [vmem:[#allocation2 + $0xc8] sm:$0xff] 0.0
    %47 = vst [vmem:[#allocation2 + $0xd0] sm:$0xff] 0.0
    %48 = vst [vmem:[#allocation2 + $0xd8] sm:$0xff] 0.0
    %49 = vst [vmem:[#allocation2 + $0xe0] sm:$0xff] 0.0
    %50 = vst [vmem:[#allocation2 + $0xe8] sm:$0xff] 0.0
    %51 = vst [vmem:[#allocation2 + $0xf0] sm:$0xff] 0.0
    %52 = vst [vmem:[#allocation2 + $0xf8] sm:$0xff] 0.0
  $region21: #{gcn_forward.2} parent=0 // pred_fallthru
    _
  %v53 = vld [vmem:[%s1] sm:$0xf]
  %v54 = vld [vmem:[%s1 + $0x4] sm:$0xf]
  %v55 = vld [vmem:[%s1 + $0x8] sm:$0xf]
  %v56 = vld [vmem:[%s1 + $0xc] sm:$0xf]
  %v57 = vld [vmem:[%s1 + $0x10] sm:$0xf]
  %v58 = vld [vmem:[%s1 + $0x14] sm:$0xf]
  %v59 = vld [vmem:[%s1 + $0x18] sm:$0xf]
  %v60 = vld [vmem:[%s1 + $0x1c] sm:$0xf]
  %v61 = vld [vmem:[%s1 + $0x20] sm:$0xf]
  %v62 = vld [vmem:[%s1 + $0x24] sm:$0xf]
  %v63 = vld [vmem:[%s1 + $0x28] sm:$0xf]
  %v64 = vld [vmem:[%s1 + $0x2c] sm:$0xf]
  %v65 = vld [vmem:[%s1 + $0x30] sm:$0xf]
  %v66 = vld [vmem:[%s1 + $0x34] sm:$0xf]
  %v67 = vld [vmem:[%s1 + $0x38] sm:$0xf]
  %v68 = vld [vmem:[%s1 + $0x3c] sm:$0xf]
  %v69 = vld [vmem:[%s1 + $0x40] sm:$0xf]
  %v70 = vld [vmem:[%s1 + $0x44] sm:$0xf]
  %v71 = vld [vmem:[%s1 + $0x48] sm:$0xf]
  %v72 = vld [vmem:[%s1 + $0x4c] sm:$0xf]
  %v73 = vld [vmem:[%s1 + $0x50] sm:$0xf]
  %v74 = vld [vmem:[%s1 + $0x54] sm:$0xf]
  %v75 = vld [vmem:[%s1 + $0x58] sm:$0xf]
  %v76 = vld [vmem:[%s1 + $0x5c] sm:$0xf]
  %v77 = vld [vmem:[%s1 + $0x60] sm:$0xf]
  %v78 = vld [vmem:[%s1 + $0x64] sm:$0xf]
  %v79 = vld [vmem:[%s1 + $0x68] sm:$0xf]
  %v80 = vld [vmem:[%s1 + $0x6c] sm:$0xf]
  %v81 = vld [vmem:[%s1 + $0x70] sm:$0xf]
  %v82 = vld [vmem:[%s1 + $0x74] sm:$0xf]
  %v83 = vld [vmem:[%s1 + $0x78] sm:$0xf]
  %v84 = vld [vmem:[%s1 + $0x7c] sm:$0xf]
  %v85 = vld [vmem:[%s2] sm:$0xf]
  %v86 = vld [vmem:[%s2 + $0x4] sm:$0xf]
  %v87 = vld [vmem:[%s2 + $0x8] sm:$0xf]
  %v88 = vld [vmem:[%s2 + $0xc] sm:$0xf]
  %v89 = vld [vmem:[%s2 + $0x10] sm:$0xf]
  %v90 = vld [vmem:[%s2 + $0x14] sm:$0xf]
  %v91 = vld [vmem:[%s2 + $0x18] sm:$0xf]
  %v92 = vld [vmem:[%s2 + $0x1c] sm:$0xf]
  %v93 = vld [vmem:[%s2 + $0x20] sm:$0xf]
  %v94 = vld [vmem:[%s2 + $0x24] sm:$0xf]
  %v95 = vld [vmem:[%s2 + $0x28] sm:$0xf]
  %v96 = vld [vmem:[%s2 + $0x2c] sm:$0xf]
  %v97 = vld [vmem:[%s2 + $0x30] sm:$0xf]
  %v98 = vld [vmem:[%s2 + $0x34] sm:$0xf]
  %v99 = vld [vmem:[%s2 + $0x38] sm:$0xf]
  %v100 = vld [vmem:[%s2 + $0x3c] sm:$0xf]
  %v133 = vunpack.c.l.b16 %v53
  %v134 = vunpack.c.l.b16 %v54
  %v135 = vunpack.c.l.b16 %v55
  %v136 = vunpack.c.l.b16 %v56
  %v137 = vunpack.c.l.b16 %v57
  %v138 = vunpack.c.l.b16 %v58
  %v139 = vunpack.c.l.b16 %v59
  %v140 = vunpack.c.l.b16 %v60
  %v141 = vunpack.c.l.b16 %v61
  %v142 = vunpack.c.l.b16 %v62
  %v143 = vunpack.c.l.b16 %v63
  %v144 = vunpack.c.l.b16 %v64
  %v145 = vunpack.c.l.b16 %v65
  %v146 = vunpack.c.l.b16 %v66
  %v147 = vunpack.c.l.b16 %v67
  %v148 = vunpack.c.l.b16 %v68
  %v149 = vunpack.c.l.b16 %v69
  %v150 = vunpack.c.l.b16 %v70
  %v151 = vunpack.c.l.b16 %v71
  %v152 = vunpack.c.l.b16 %v72
  %v153 = vunpack.c.l.b16 %v73
  %v154 = vunpack.c.l.b16 %v74
  %v155 = vunpack.c.l.b16 %v75
  %v156 = vunpack.c.l.b16 %v76
  %v157 = vunpack.c.l.b16 %v77
  %v158 = vunpack.c.l.b16 %v78
  %v159 = vunpack.c.l.b16 %v79
  %v160 = vunpack.c.l.b16 %v80
  %v161 = vunpack.c.l.b16 %v81
  %v162 = vunpack.c.l.b16 %v82
  %v163 = vunpack.c.l.b16 %v83
  %v164 = vunpack.c.l.b16 %v84
  %v165 = vpack.c.b16 %v134, %v133
  %v166 = vpack.c.b16 %v136, %v135
  %v167 = vpack.c.b16 %v138, %v137
  %v168 = vpack.c.b16 %v140, %v139
  %v169 = vpack.c.b16 %v142, %v141
  %v170 = vpack.c.b16 %v144, %v143
  %v171 = vpack.c.b16 %v146, %v145
  %v172 = vpack.c.b16 %v148, %v147
  %v173 = vpack.c.b16 %v150, %v149
  %v174 = vpack.c.b16 %v152, %v151
  %v175 = vpack.c.b16 %v154, %v153
  %v176 = vpack.c.b16 %v156, %v155
  %v177 = vpack.c.b16 %v158, %v157
  %v178 = vpack.c.b16 %v160, %v159
  %v179 = vpack.c.b16 %v162, %v161
  %v180 = vpack.c.b16 %v164, %v163
  %v213 = vunpack.c.l.b16 %v85
  %v214 = vunpack.c.l.b16 %v86
  %v215 = vunpack.c.l.b16 %v87
  %v216 = vunpack.c.l.b16 %v88
  %v217 = vunpack.c.l.b16 %v89
  %v218 = vunpack.c.l.b16 %v90
  %v219 = vunpack.c.l.b16 %v91
  %v220 = vunpack.c.l.b16 %v92
  %v221 = vunpack.c.l.b16 %v93
  %v222 = vunpack.c.l.b16 %v94
  %v223 = vunpack.c.l.b16 %v95
  %v224 = vunpack.c.l.b16 %v96
  %v225 = vunpack.c.l.b16 %v97
  %v226 = vunpack.c.l.b16 %v98
  %v227 = vunpack.c.l.b16 %v99
  %v228 = vunpack.c.l.b16 %v100
  %v229 = vpack.c.b16 %v214, %v213
  %v230 = vpack.c.b16 %v216, %v215
  %v231 = vpack.c.b16 %v218, %v217
  %v232 = vpack.c.b16 %v220, %v219
  %v233 = vpack.c.b16 %v222, %v221
  %v234 = vpack.c.b16 %v224, %v223
  %v235 = vpack.c.b16 %v226, %v225
  %v236 = vpack.c.b16 %v228, %v227
  %245 = vmatpush.bf16.msra.mxu0 %v236
  %246 = vmatpush.bf16.msra.mxu0 %v235
  %247 = vmatpush.bf16.msra.mxu0 %v234
  %248 = vmatpush.bf16.msra.mxu0 %v233
  %249 = vmatpush.bf16.msra.mxu0 %v232
  %250 = vmatpush.bf16.msra.mxu0 %v231
  %251 = vmatpush.bf16.msra.mxu0 %v230
  %252 = vmatpush.bf16.msra.mxu0 %v229
  %253 = vmatmul.bf16.gmra.mxu0 %v165
  %v254 = vpop.f32.mrf.mxu0
  %v255 = vadd.f32 0.0, %v254
  %v256 = vpop.f32.mrf.mxu0
  %v257 = vadd.f32 0.0, %v256
  %258 = vmatmul.bf16.gmra.mxu0 %v166
  %v259 = vpop.f32.mrf.mxu0
  %v260 = vadd.f32 0.0, %v259
  %v261 = vpop.f32.mrf.mxu0
  %v262 = vadd.f32 0.0, %v261
  %263 = vmatmul.bf16.gmra.mxu0 %v167
  %v264 = vpop.f32.mrf.mxu0
  %v265 = vadd.f32 0.0, %v264
  %v266 = vpop.f32.mrf.mxu0
  %v267 = vadd.f32 0.0, %v266
  %268 = vmatmul.bf16.gmra.mxu0 %v168
  %v269 = vpop.f32.mrf.mxu0
  %v270 = vadd.f32 0.0, %v269
  %v271 = vpop.f32.mrf.mxu0
  %v272 = vadd.f32 0.0, %v271
  %273 = vmatmul.bf16.gmra.mxu0 %v169
  %v274 = vpop.f32.mrf.mxu0
  %v275 = vadd.f32 0.0, %v274
  %v276 = vpop.f32.mrf.mxu0
  %v277 = vadd.f32 0.0, %v276
  %278 = vmatmul.bf16.gmra.mxu0 %v170
  %v279 = vpop.f32.mrf.mxu0
  %v280 = vadd.f32 0.0, %v279
  %v281 = vpop.f32.mrf.mxu0
  %v282 = vadd.f32 0.0, %v281
  %283 = vmatmul.bf16.gmra.mxu0 %v171
  %v284 = vpop.f32.mrf.mxu0
  %v285 = vadd.f32 0.0, %v284
  %v286 = vpop.f32.mrf.mxu0
  %v287 = vadd.f32 0.0, %v286
  %288 = vmatmul.bf16.gmra.mxu0 %v172
  %v289 = vpop.f32.mrf.mxu0
  %v290 = vadd.f32 0.0, %v289
  %v291 = vpop.f32.mrf.mxu0
  %v292 = vadd.f32 0.0, %v291
  %293 = vmatmul.bf16.gmra.mxu0 %v173
  %v294 = vpop.f32.mrf.mxu0
  %v295 = vadd.f32 0.0, %v294
  %v296 = vpop.f32.mrf.mxu0
  %v297 = vadd.f32 0.0, %v296
  %298 = vmatmul.bf16.gmra.mxu0 %v174
  %v299 = vpop.f32.mrf.mxu0
  %v300 = vadd.f32 0.0, %v299
  %v301 = vpop.f32.mrf.mxu0
  %v302 = vadd.f32 0.0, %v301
  %303 = vmatmul.bf16.gmra.mxu0 %v175
  %v304 = vpop.f32.mrf.mxu0
  %v305 = vadd.f32 0.0, %v304
  %v306 = vpop.f32.mrf.mxu0
  %v307 = vadd.f32 0.0, %v306
  %308 = vmatmul.bf16.gmra.mxu0 %v176
  %v309 = vpop.f32.mrf.mxu0
  %v310 = vadd.f32 0.0, %v309
  %v311 = vpop.f32.mrf.mxu0
  %v312 = vadd.f32 0.0, %v311
  %313 = vmatmul.bf16.gmra.mxu0 %v177
  %v314 = vpop.f32.mrf.mxu0
  %v315 = vadd.f32 0.0, %v314
  %v316 = vpop.f32.mrf.mxu0
  %v317 = vadd.f32 0.0, %v316
  %318 = vmatmul.bf16.gmra.mxu0 %v178
  %v319 = vpop.f32.mrf.mxu0
  %v320 = vadd.f32 0.0, %v319
  %v321 = vpop.f32.mrf.mxu0
  %v322 = vadd.f32 0.0, %v321
  %323 = vmatmul.bf16.gmra.mxu0 %v179
  %v324 = vpop.f32.mrf.mxu0
  %v325 = vadd.f32 0.0, %v324
  %v326 = vpop.f32.mrf.mxu0
  %v327 = vadd.f32 0.0, %v326
  %328 = vmatmul.bf16.gmra.mxu0 %v180
  %v329 = vpop.f32.mrf.mxu0
  %v330 = vadd.f32 0.0, %v329
  %v331 = vpop.f32.mrf.mxu0
  %v332 = vadd.f32 0.0, %v331
  %333 = vdwg.mxu0
  %v334 = vld [vmem:[#allocation2] sm:$0xff]
  %v335 = vld [vmem:[#allocation2 + $0x8] sm:$0xff]
  %v336 = vld [vmem:[#allocation2 + $0x10] sm:$0xff]
  %v337 = vld [vmem:[#allocation2 + $0x18] sm:$0xff]
  %v338 = vld [vmem:[#allocation2 + $0x20] sm:$0xff]
  %v339 = vld [vmem:[#allocation2 + $0x28] sm:$0xff]
  %v340 = vld [vmem:[#allocation2 + $0x30] sm:$0xff]
  %v341 = vld [vmem:[#allocation2 + $0x38] sm:$0xff]
  %v342 = vld [vmem:[#allocation2 + $0x40] sm:$0xff]
  %v343 = vld [vmem:[#allocation2 + $0x48] sm:$0xff]
  %v344 = vld [vmem:[#allocation2 + $0x50] sm:$0xff]
  %v345 = vld [vmem:[#allocation2 + $0x58] sm:$0xff]
  %v346 = vld [vmem:[#allocation2 + $0x60] sm:$0xff]
  %v347 = vld [vmem:[#allocation2 + $0x68] sm:$0xff]
  %v348 = vld [vmem:[#allocation2 + $0x70] sm:$0xff]
  %v349 = vld [vmem:[#allocation2 + $0x78] sm:$0xff]
  %v350 = vld [vmem:[#allocation2 + $0x80] sm:$0xff]
  %v351 = vld [vmem:[#allocation2 + $0x88] sm:$0xff]
  %v352 = vld [vmem:[#allocation2 + $0x90] sm:$0xff]
  %v353 = vld [vmem:[#allocation2 + $0x98] sm:$0xff]
  %v354 = vld [vmem:[#allocation2 + $0xa0] sm:$0xff]
  %v355 = vld [vmem:[#allocation2 + $0xa8] sm:$0xff]
  %v356 = vld [vmem:[#allocation2 + $0xb0] sm:$0xff]
  %v357 = vld [vmem:[#allocation2 + $0xb8] sm:$0xff]
  %v358 = vld [vmem:[#allocation2 + $0xc0] sm:$0xff]
  %v359 = vld [vmem:[#allocation2 + $0xc8] sm:$0xff]
  %v360 = vld [vmem:[#allocation2 + $0xd0] sm:$0xff]
  %v361 = vld [vmem:[#allocation2 + $0xd8] sm:$0xff]
  %v362 = vld [vmem:[#allocation2 + $0xe0] sm:$0xff]
  %v363 = vld [vmem:[#allocation2 + $0xe8] sm:$0xff]
  %v364 = vld [vmem:[#allocation2 + $0xf0] sm:$0xff]
  %v365 = vld [vmem:[#allocation2 + $0xf8] sm:$0xff]
  %v366 = vld [vmem:[%s0] sm:$0xff]
  %v367 = vld [vmem:[%s0 + $0x8] sm:$0xff]
  %v368 = vld [vmem:[%s0 + $0x10] sm:$0xff]
  %v369 = vld [vmem:[%s0 + $0x18] sm:$0xff]
  %v370 = vld [vmem:[%s0 + $0x20] sm:$0xff]
  %v371 = vld [vmem:[%s0 + $0x28] sm:$0xff]
  %v372 = vld [vmem:[%s0 + $0x30] sm:$0xff]
  %v373 = vld [vmem:[%s0 + $0x38] sm:$0xff]
  %v374 = vld [vmem:[%s0 + $0x40] sm:$0xff]
  %v375 = vld [vmem:[%s0 + $0x48] sm:$0xff]
  %v376 = vld [vmem:[%s0 + $0x50] sm:$0xff]
  %v377 = vld [vmem:[%s0 + $0x58] sm:$0xff]
  %v378 = vld [vmem:[%s0 + $0x60] sm:$0xff]
  %v379 = vld [vmem:[%s0 + $0x68] sm:$0xff]
  %v380 = vld [vmem:[%s0 + $0x70] sm:$0xff]
  %v381 = vld [vmem:[%s0 + $0x78] sm:$0xff]
  %v382 = vld [vmem:[%s0 + $0x80] sm:$0xff]
  %v383 = vld [vmem:[%s0 + $0x88] sm:$0xff]
  %v384 = vld [vmem:[%s0 + $0x90] sm:$0xff]
  %v385 = vld [vmem:[%s0 + $0x98] sm:$0xff]
  %v386 = vld [vmem:[%s0 + $0xa0] sm:$0xff]
  %v387 = vld [vmem:[%s0 + $0xa8] sm:$0xff]
  %v388 = vld [vmem:[%s0 + $0xb0] sm:$0xff]
  %v389 = vld [vmem:[%s0 + $0xb8] sm:$0xff]
  %v390 = vld [vmem:[%s0 + $0xc0] sm:$0xff]
  %v391 = vld [vmem:[%s0 + $0xc8] sm:$0xff]
  %v392 = vld [vmem:[%s0 + $0xd0] sm:$0xff]
  %v393 = vld [vmem:[%s0 + $0xd8] sm:$0xff]
  %v394 = vld [vmem:[%s0 + $0xe0] sm:$0xff]
  %v395 = vld [vmem:[%s0 + $0xe8] sm:$0xff]
  %v396 = vld [vmem:[%s0 + $0xf0] sm:$0xff]
  %v397 = vld [vmem:[%s0 + $0xf8] sm:$0xff]
  %v398 = vpack.c.bf16 %v257, %v255
  %v399 = vpack.c.bf16 %v262, %v260
  %v400 = vpack.c.bf16 %v267, %v265
  %v401 = vpack.c.bf16 %v272, %v270
  %v402 = vpack.c.bf16 %v277, %v275
  %v403 = vpack.c.bf16 %v282, %v280
  %v404 = vpack.c.bf16 %v287, %v285
  %v405 = vpack.c.bf16 %v292, %v290
  %v406 = vpack.c.bf16 %v297, %v295
  %v407 = vpack.c.bf16 %v302, %v300
  %v408 = vpack.c.bf16 %v307, %v305
  %v409 = vpack.c.bf16 %v312, %v310
  %v410 = vpack.c.bf16 %v317, %v315
  %v411 = vpack.c.bf16 %v322, %v320
  %v412 = vpack.c.bf16 %v327, %v325
  %v413 = vpack.c.bf16 %v332, %v330
  %v446 = vunpack.c.l.b16 %v366
  %v447 = vunpack.c.h.b16 %v366
  %v448 = vunpack.c.l.b16 %v367
  %v449 = vunpack.c.h.b16 %v367
  %v450 = vunpack.c.l.b16 %v368
  %v451 = vunpack.c.h.b16 %v368
  %v452 = vunpack.c.l.b16 %v369
  %v453 = vunpack.c.h.b16 %v369
  %v454 = vunpack.c.l.b16 %v370
  %v455 = vunpack.c.h.b16 %v370
  %v456 = vunpack.c.l.b16 %v371
  %v457 = vunpack.c.h.b16 %v371
  %v458 = vunpack.c.l.b16 %v372
  %v459 = vunpack.c.h.b16 %v372
  %v460 = vunpack.c.l.b16 %v373
  %v461 = vunpack.c.h.b16 %v373
  %v462 = vunpack.c.l.b16 %v374
  %v463 = vunpack.c.h.b16 %v374
  %v464 = vunpack.c.l.b16 %v375
  %v465 = vunpack.c.h.b16 %v375
  %v466 = vunpack.c.l.b16 %v376
  %v467 = vunpack.c.h.b16 %v376
  %v468 = vunpack.c.l.b16 %v377
  %v469 = vunpack.c.h.b16 %v377
  %v470 = vunpack.c.l.b16 %v378
  %v471 = vunpack.c.h.b16 %v378
  %v472 = vunpack.c.l.b16 %v379
  %v473 = vunpack.c.h.b16 %v379
  %v474 = vunpack.c.l.b16 %v380
  %v475 = vunpack.c.h.b16 %v380
  %v476 = vunpack.c.l.b16 %v381
  %v477 = vunpack.c.h.b16 %v381
  %v478 = vunpack.c.l.b16 %v382
  %v479 = vunpack.c.h.b16 %v382
  %v480 = vunpack.c.l.b16 %v383
  %v481 = vunpack.c.h.b16 %v383
  %v482 = vunpack.c.l.b16 %v384
  %v483 = vunpack.c.h.b16 %v384
  %v484 = vunpack.c.l.b16 %v385
  %v485 = vunpack.c.h.b16 %v385
  %v486 = vunpack.c.l.b16 %v386
  %v487 = vunpack.c.h.b16 %v386
  %v488 = vunpack.c.l.b16 %v387
  %v489 = vunpack.c.h.b16 %v387
  %v490 = vunpack.c.l.b16 %v388
  %v491 = vunpack.c.h.b16 %v388
  %v492 = vunpack.c.l.b16 %v389
  %v493 = vunpack.c.h.b16 %v389
  %v494 = vunpack.c.l.b16 %v390
  %v495 = vunpack.c.h.b16 %v390
  %v496 = vunpack.c.l.b16 %v391
  %v497 = vunpack.c.h.b16 %v391
  %v498 = vunpack.c.l.b16 %v392
  %v499 = vunpack.c.h.b16 %v392
  %v500 = vunpack.c.l.b16 %v393
  %v501 = vunpack.c.h.b16 %v393
  %v502 = vunpack.c.l.b16 %v394
  %v503 = vunpack.c.h.b16 %v394
  %v504 = vunpack.c.l.b16 %v395
  %v505 = vunpack.c.h.b16 %v395
  %v506 = vunpack.c.l.b16 %v396
  %v507 = vunpack.c.h.b16 %v396
  %v508 = vunpack.c.l.b16 %v397
  %v509 = vunpack.c.h.b16 %v397
  %v510 = vpack.c.b16 %v448, %v446
  %v511 = vpack.c.b16 %v449, %v447
  %v512 = vpack.c.b16 %v452, %v450
  %v513 = vpack.c.b16 %v453, %v451
  %v514 = vpack.c.b16 %v456, %v454
  %v515 = vpack.c.b16 %v457, %v455
  %v516 = vpack.c.b16 %v460, %v458
  %v517 = vpack.c.b16 %v461, %v459
  %v518 = vpack.c.b16 %v464, %v462
  %v519 = vpack.c.b16 %v465, %v463
  %v520 = vpack.c.b16 %v468, %v466
  %v521 = vpack.c.b16 %v469, %v467
  %v522 = vpack.c.b16 %v472, %v470
  %v523 = vpack.c.b16 %v473, %v471
  %v524 = vpack.c.b16 %v476, %v474
  %v525 = vpack.c.b16 %v477, %v475
  %v526 = vpack.c.b16 %v480, %v478
  %v527 = vpack.c.b16 %v481, %v479
  %v528 = vpack.c.b16 %v484, %v482
  %v529 = vpack.c.b16 %v485, %v483
  %v530 = vpack.c.b16 %v488, %v486
  %v531 = vpack.c.b16 %v489, %v487
  %v532 = vpack.c.b16 %v492, %v490
  %v533 = vpack.c.b16 %v493, %v491
  %v534 = vpack.c.b16 %v496, %v494
  %v535 = vpack.c.b16 %v497, %v495
  %v536 = vpack.c.b16 %v500, %v498
  %v537 = vpack.c.b16 %v501, %v499
  %v538 = vpack.c.b16 %v504, %v502
  %v539 = vpack.c.b16 %v505, %v503
  %v540 = vpack.c.b16 %v508, %v506
  %v541 = vpack.c.b16 %v509, %v507
  %574 = vmatpush.bf16.msra.mxu0 %v405
  %575 = vmatpush.bf16.msra.mxu0 %v404
  %576 = vmatpush.bf16.msra.mxu0 %v403
  %577 = vmatpush.bf16.msra.mxu0 %v402
  %578 = vmatpush.bf16.msra.mxu0 %v401
  %579 = vmatpush.bf16.msra.mxu0 %v400
  %580 = vmatpush.bf16.msra.mxu0 %v399
  %581 = vmatpush.bf16.msra.mxu0 %v398
  %582 = vmatmul.bf16.gmra.mxu0 %v510
  %v583 = vpop.f32.mrf.mxu0
  %v584 = vadd.f32 0.0, %v583
  %v585 = vpop.f32.mrf.mxu0
  %v586 = vadd.f32 0.0, %v585
  %587 = vmatmul.bf16.gmra.mxu0 %v512
  %v588 = vpop.f32.mrf.mxu0
  %v589 = vadd.f32 0.0, %v588
  %v590 = vpop.f32.mrf.mxu0
  %v591 = vadd.f32 0.0, %v590
  %592 = vmatmul.bf16.gmra.mxu0 %v514
  %v593 = vpop.f32.mrf.mxu0
  %v594 = vadd.f32 0.0, %v593
  %v595 = vpop.f32.mrf.mxu0
  %v596 = vadd.f32 0.0, %v595
  %597 = vmatmul.bf16.gmra.mxu0 %v516
  %v598 = vpop.f32.mrf.mxu0
  %v599 = vadd.f32 0.0, %v598
  %v600 = vpop.f32.mrf.mxu0
  %v601 = vadd.f32 0.0, %v600
  %602 = vmatmul.bf16.gmra.mxu0 %v518
  %v603 = vpop.f32.mrf.mxu0
  %v604 = vadd.f32 0.0, %v603
  %v605 = vpop.f32.mrf.mxu0
  %v606 = vadd.f32 0.0, %v605
  %607 = vmatmul.bf16.gmra.mxu0 %v520
  %v608 = vpop.f32.mrf.mxu0
  %v609 = vadd.f32 0.0, %v608
  %v610 = vpop.f32.mrf.mxu0
  %v611 = vadd.f32 0.0, %v610
  %612 = vmatmul.bf16.gmra.mxu0 %v522
  %v613 = vpop.f32.mrf.mxu0
  %v614 = vadd.f32 0.0, %v613
  %v615 = vpop.f32.mrf.mxu0
  %v616 = vadd.f32 0.0, %v615
  %617 = vmatmul.bf16.gmra.mxu0 %v524
  %v618 = vpop.f32.mrf.mxu0
  %v619 = vadd.f32 0.0, %v618
  %v620 = vpop.f32.mrf.mxu0
  %v621 = vadd.f32 0.0, %v620
  %622 = vmatmul.bf16.gmra.mxu0 %v526
  %v623 = vpop.f32.mrf.mxu0
  %v624 = vadd.f32 0.0, %v623
  %v625 = vpop.f32.mrf.mxu0
  %v626 = vadd.f32 0.0, %v625
  %627 = vmatmul.bf16.gmra.mxu0 %v528
  %v628 = vpop.f32.mrf.mxu0
  %v629 = vadd.f32 0.0, %v628
  %v630 = vpop.f32.mrf.mxu0
  %v631 = vadd.f32 0.0, %v630
  %632 = vmatmul.bf16.gmra.mxu0 %v530
  %v633 = vpop.f32.mrf.mxu0
  %v634 = vadd.f32 0.0, %v633
  %v635 = vpop.f32.mrf.mxu0
  %v636 = vadd.f32 0.0, %v635
  %637 = vmatmul.bf16.gmra.mxu0 %v532
  %v638 = vpop.f32.mrf.mxu0
  %v639 = vadd.f32 0.0, %v638
  %v640 = vpop.f32.mrf.mxu0
  %v641 = vadd.f32 0.0, %v640
  %642 = vmatmul.bf16.gmra.mxu0 %v534
  %v643 = vpop.f32.mrf.mxu0
  %v644 = vadd.f32 0.0, %v643
  %v645 = vpop.f32.mrf.mxu0
  %v646 = vadd.f32 0.0, %v645
  %647 = vmatmul.bf16.gmra.mxu0 %v536
  %v648 = vpop.f32.mrf.mxu0
  %v649 = vadd.f32 0.0, %v648
  %v650 = vpop.f32.mrf.mxu0
  %v651 = vadd.f32 0.0, %v650
  %652 = vmatmul.bf16.gmra.mxu0 %v538
  %v653 = vpop.f32.mrf.mxu0
  %v654 = vadd.f32 0.0, %v653
  %v655 = vpop.f32.mrf.mxu0
  %v656 = vadd.f32 0.0, %v655
  %657 = vmatmul.bf16.gmra.mxu0 %v540
  %v658 = vpop.f32.mrf.mxu0
  %v659 = vadd.f32 0.0, %v658
  %v660 = vpop.f32.mrf.mxu0
  %v661 = vadd.f32 0.0, %v660
  %662 = vdwg.mxu0
  %663 = vmatpush.bf16.msra.mxu0 %v413
  %664 = vmatpush.bf16.msra.mxu0 %v412
  %665 = vmatpush.bf16.msra.mxu0 %v411
  %666 = vmatpush.bf16.msra.mxu0 %v410
  %667 = vmatpush.bf16.msra.mxu0 %v409
  %668 = vmatpush.bf16.msra.mxu0 %v408
  %669 = vmatpush.bf16.msra.mxu0 %v407
  %670 = vmatpush.bf16.msra.mxu0 %v406
  %671 = vmatmul.bf16.gmra.mxu0 %v511
  %v672 = vpop.f32.mrf.mxu0
  %v673 = vadd.f32 %v584, %v672
  %v674 = vpop.f32.mrf.mxu0
  %v675 = vadd.f32 %v586, %v674
  %676 = vmatmul.bf16.gmra.mxu0 %v513
  %v677 = vpop.f32.mrf.mxu0
  %v678 = vadd.f32 %v589, %v677
  %v679 = vpop.f32.mrf.mxu0
  %v680 = vadd.f32 %v591, %v679
  %681 = vmatmul.bf16.gmra.mxu0 %v515
  %v682 = vpop.f32.mrf.mxu0
  %v683 = vadd.f32 %v594, %v682
  %v684 = vpop.f32.mrf.mxu0
  %v685 = vadd.f32 %v596, %v684
  %686 = vmatmul.bf16.gmra.mxu0 %v517
  %v687 = vpop.f32.mrf.mxu0
  %v688 = vadd.f32 %v599, %v687
  %v689 = vpop.f32.mrf.mxu0
  %v690 = vadd.f32 %v601, %v689
  %691 = vmatmul.bf16.gmra.mxu0 %v519
  %v692 = vpop.f32.mrf.mxu0
  %v693 = vadd.f32 %v604, %v692
  %v694 = vpop.f32.mrf.mxu0
  %v695 = vadd.f32 %v606, %v694
  %696 = vmatmul.bf16.gmra.mxu0 %v521
  %v697 = vpop.f32.mrf.mxu0
  %v698 = vadd.f32 %v609, %v697
  %v699 = vpop.f32.mrf.mxu0
  %v700 = vadd.f32 %v611, %v699
  %701 = vmatmul.bf16.gmra.mxu0 %v523
  %v702 = vpop.f32.mrf.mxu0
  %v703 = vadd.f32 %v614, %v702
  %v704 = vpop.f32.mrf.mxu0
  %v705 = vadd.f32 %v616, %v704
  %706 = vmatmul.bf16.gmra.mxu0 %v525
  %v707 = vpop.f32.mrf.mxu0
  %v708 = vadd.f32 %v619, %v707
  %v709 = vpop.f32.mrf.mxu0
  %v710 = vadd.f32 %v621, %v709
  %711 = vmatmul.bf16.gmra.mxu0 %v527
  %v712 = vpop.f32.mrf.mxu0
  %v713 = vadd.f32 %v624, %v712
  %v714 = vpop.f32.mrf.mxu0
  %v715 = vadd.f32 %v626, %v714
  %716 = vmatmul.bf16.gmra.mxu0 %v529
  %v717 = vpop.f32.mrf.mxu0
  %v718 = vadd.f32 %v629, %v717
  %v719 = vpop.f32.mrf.mxu0
  %v720 = vadd.f32 %v631, %v719
  %721 = vmatmul.bf16.gmra.mxu0 %v531
  %v722 = vpop.f32.mrf.mxu0
  %v723 = vadd.f32 %v634, %v722
  %v724 = vpop.f32.mrf.mxu0
  %v725 = vadd.f32 %v636, %v724
  %726 = vmatmul.bf16.gmra.mxu0 %v533
  %v727 = vpop.f32.mrf.mxu0
  %v728 = vadd.f32 %v639, %v727
  %v729 = vpop.f32.mrf.mxu0
  %v730 = vadd.f32 %v641, %v729
  %731 = vmatmul.bf16.gmra.mxu0 %v535
  %v732 = vpop.f32.mrf.mxu0
  %v733 = vadd.f32 %v644, %v732
  %v734 = vpop.f32.mrf.mxu0
  %v735 = vadd.f32 %v646, %v734
  %736 = vmatmul.bf16.gmra.mxu0 %v537
  %v737 = vpop.f32.mrf.mxu0
  %v738 = vadd.f32 %v649, %v737
  %v739 = vpop.f32.mrf.mxu0
  %v740 = vadd.f32 %v651, %v739
  %741 = vmatmul.bf16.gmra.mxu0 %v539
  %v742 = vpop.f32.mrf.mxu0
  %v743 = vadd.f32 %v654, %v742
  %v744 = vpop.f32.mrf.mxu0
  %v745 = vadd.f32 %v656, %v744
  %746 = vmatmul.bf16.gmra.mxu0 %v541
  %v747 = vpop.f32.mrf.mxu0
  %v748 = vadd.f32 %v659, %v747
  %v749 = vpop.f32.mrf.mxu0
  %v750 = vadd.f32 %v661, %v749
  %751 = vdwg.mxu0
  %v752 = vadd.f32 %v334, %v673
  %v753 = vadd.f32 %v335, %v675
  %v754 = vadd.f32 %v336, %v678
  %v755 = vadd.f32 %v337, %v680
  %v756 = vadd.f32 %v338, %v683
  %v757 = vadd.f32 %v339, %v685
  %v758 = vadd.f32 %v340, %v688
  %v759 = vadd.f32 %v341, %v690
  %v760 = vadd.f32 %v342, %v693
  %v761 = vadd.f32 %v343, %v695
  %v762 = vadd.f32 %v344, %v698
  %v763 = vadd.f32 %v345, %v700
  %v764 = vadd.f32 %v346, %v703
  %v765 = vadd.f32 %v347, %v705
  %v766 = vadd.f32 %v348, %v708
  %v767 = vadd.f32 %v349, %v710
  %v768 = vadd.f32 %v350, %v713
  %v769 = vadd.f32 %v351, %v715
  %v770 = vadd.f32 %v352, %v718
  %v771 = vadd.f32 %v353, %v720
  %v772 = vadd.f32 %v354, %v723
  %v773 = vadd.f32 %v355, %v725
  %v774 = vadd.f32 %v356, %v728
  %v775 = vadd.f32 %v357, %v730
  %v776 = vadd.f32 %v358, %v733
  %v777 = vadd.f32 %v359, %v735
  %v778 = vadd.f32 %v360, %v738
  %v779 = vadd.f32 %v361, %v740
  %v780 = vadd.f32 %v362, %v743
  %v781 = vadd.f32 %v363, %v745
  %v782 = vadd.f32 %v364, %v748
  %v783 = vadd.f32 %v365, %v750
  %784 = vst [vmem:[#allocation2] sm:$0xff] %v752
  %785 = vst [vmem:[#allocation2 + $0x8] sm:$0xff] %v753
  %786 = vst [vmem:[#allocation2 + $0x10] sm:$0xff] %v754
  %787 = vst [vmem:[#allocation2 + $0x18] sm:$0xff] %v755
  %788 = vst [vmem:[#allocation2 + $0x20] sm:$0xff] %v756
  %789 = vst [vmem:[#allocation2 + $0x28] sm:$0xff] %v757
  %790 = vst [vmem:[#allocation2 + $0x30] sm:$0xff] %v758
  %791 = vst [vmem:[#allocation2 + $0x38] sm:$0xff] %v759
  %792 = vst [vmem:[#allocation2 + $0x40] sm:$0xff] %v760
  %793 = vst [vmem:[#allocation2 + $0x48] sm:$0xff] %v761
  %794 = vst [vmem:[#allocation2 + $0x50] sm:$0xff] %v762
  %795 = vst [vmem:[#allocation2 + $0x58] sm:$0xff] %v763
  %796 = vst [vmem:[#allocation2 + $0x60] sm:$0xff] %v764
  %797 = vst [vmem:[#allocation2 + $0x68] sm:$0xff] %v765
  %798 = vst [vmem:[#allocation2 + $0x70] sm:$0xff] %v766
  %799 = vst [vmem:[#allocation2 + $0x78] sm:$0xff] %v767
  %800 = vst [vmem:[#allocation2 + $0x80] sm:$0xff] %v768
  %801 = vst [vmem:[#allocation2 + $0x88] sm:$0xff] %v769
  %802 = vst [vmem:[#allocation2 + $0x90] sm:$0xff] %v770
  %803 = vst [vmem:[#allocation2 + $0x98] sm:$0xff] %v771
  %804 = vst [vmem:[#allocation2 + $0xa0] sm:$0xff] %v772
  %805 = vst [vmem:[#allocation2 + $0xa8] sm:$0xff] %v773
  %806 = vst [vmem:[#allocation2 + $0xb0] sm:$0xff] %v774
  %807 = vst [vmem:[#allocation2 + $0xb8] sm:$0xff] %v775
  %808 = vst [vmem:[#allocation2 + $0xc0] sm:$0xff] %v776
  %809 = vst [vmem:[#allocation2 + $0xc8] sm:$0xff] %v777
  %810 = vst [vmem:[#allocation2 + $0xd0] sm:$0xff] %v778
  %811 = vst [vmem:[#allocation2 + $0xd8] sm:$0xff] %v779
  %812 = vst [vmem:[#allocation2 + $0xe0] sm:$0xff] %v780
  %813 = vst [vmem:[#allocation2 + $0xe8] sm:$0xff] %v781
  %814 = vst [vmem:[#allocation2 + $0xf0] sm:$0xff] %v782
  %815 = vst [vmem:[#allocation2 + $0xf8] sm:$0xff] %v783
  // Predicated region
  $region22: #{gcn_forward.2} parent=0 // pred_check
    %p816 = pneg %p17
  $region23: #{gcn_forward.2} parent=0 // pred_check_branch
    %818 = sbr.rel (%p816) target = $region25
  $region24: #{gcn_forward.2} parent=0 // pred_region
    %v819 = vld [vmem:[#allocation2] sm:$0xff]
    %v820 = vld [vmem:[#allocation2 + $0x8] sm:$0xff]
    %v821 = vld [vmem:[#allocation2 + $0x10] sm:$0xff]
    %v822 = vld [vmem:[#allocation2 + $0x18] sm:$0xff]
    %v823 = vld [vmem:[#allocation2 + $0x20] sm:$0xff]
    %v824 = vld [vmem:[#allocation2 + $0x28] sm:$0xff]
    %v825 = vld [vmem:[#allocation2 + $0x30] sm:$0xff]
    %v826 = vld [vmem:[#allocation2 + $0x38] sm:$0xff]
    %v827 = vld [vmem:[#allocation2 + $0x40] sm:$0xff]
    %v828 = vld [vmem:[#allocation2 + $0x48] sm:$0xff]
    %v829 = vld [vmem:[#allocation2 + $0x50] sm:$0xff]
    %v830 = vld [vmem:[#allocation2 + $0x58] sm:$0xff]
    %v831 = vld [vmem:[#allocation2 + $0x60] sm:$0xff]
    %v832 = vld [vmem:[#allocation2 + $0x68] sm:$0xff]
    %v833 = vld [vmem:[#allocation2 + $0x70] sm:$0xff]
    %v834 = vld [vmem:[#allocation2 + $0x78] sm:$0xff]
    %v835 = vld [vmem:[#allocation2 + $0x80] sm:$0xff]
    %v836 = vld [vmem:[#allocation2 + $0x88] sm:$0xff]
    %v837 = vld [vmem:[#allocation2 + $0x90] sm:$0xff]
    %v838 = vld [vmem:[#allocation2 + $0x98] sm:$0xff]
    %v839 = vld [vmem:[#allocation2 + $0xa0] sm:$0xff]
    %v840 = vld [vmem:[#allocation2 + $0xa8] sm:$0xff]
    %v841 = vld [vmem:[#allocation2 + $0xb0] sm:$0xff]
    %v842 = vld [vmem:[#allocation2 + $0xb8] sm:$0xff]
    %v843 = vld [vmem:[#allocation2 + $0xc0] sm:$0xff]
    %v844 = vld [vmem:[#allocation2 + $0xc8] sm:$0xff]
    %v845 = vld [vmem:[#allocation2 + $0xd0] sm:$0xff]
    %v846 = vld [vmem:[#allocation2 + $0xd8] sm:$0xff]
    %v847 = vld [vmem:[#allocation2 + $0xe0] sm:$0xff]
    %v848 = vld [vmem:[#allocation2 + $0xe8] sm:$0xff]
    %v849 = vld [vmem:[#allocation2 + $0xf0] sm:$0xff]
    %v850 = vld [vmem:[#allocation2 + $0xf8] sm:$0xff]
    %v851 = vld [vmem:[%s3] sm:$0x1]
    %v853 = vperm.slane %v851, 0
    %v855 = vadd.f32 %v819, %v853
    %v856 = vadd.f32 %v820, %v853
    %v857 = vadd.f32 %v821, %v853
    %v858 = vadd.f32 %v822, %v853
    %v859 = vadd.f32 %v823, %v853
    %v860 = vadd.f32 %v824, %v853
    %v861 = vadd.f32 %v825, %v853
    %v862 = vadd.f32 %v826, %v853
    %v863 = vadd.f32 %v827, %v853
    %v864 = vadd.f32 %v828, %v853
    %v865 = vadd.f32 %v829, %v853
    %v866 = vadd.f32 %v830, %v853
    %v867 = vadd.f32 %v831, %v853
    %v868 = vadd.f32 %v832, %v853
    %v869 = vadd.f32 %v833, %v853
    %v870 = vadd.f32 %v834, %v853
    %v871 = vadd.f32 %v835, %v853
    %v872 = vadd.f32 %v836, %v853
    %v873 = vadd.f32 %v837, %v853
    %v874 = vadd.f32 %v838, %v853
    %v875 = vadd.f32 %v839, %v853
    %v876 = vadd.f32 %v840, %v853
    %v877 = vadd.f32 %v841, %v853
    %v878 = vadd.f32 %v842, %v853
    %v879 = vadd.f32 %v843, %v853
    %v880 = vadd.f32 %v844, %v853
    %v881 = vadd.f32 %v845, %v853
    %v882 = vadd.f32 %v846, %v853
    %v883 = vadd.f32 %v847, %v853
    %v884 = vadd.f32 %v848, %v853
    %v885 = vadd.f32 %v849, %v853
    %v886 = vadd.f32 %v850, %v853
    %v887 = vmax.f32 %v855, 0.0
    %v888 = vmax.f32 %v856, 0.0
    %v889 = vmax.f32 %v857, 0.0
    %v890 = vmax.f32 %v858, 0.0
    %v891 = vmax.f32 %v859, 0.0
    %v892 = vmax.f32 %v860, 0.0
    %v893 = vmax.f32 %v861, 0.0
    %v894 = vmax.f32 %v862, 0.0
    %v895 = vmax.f32 %v863, 0.0
    %v896 = vmax.f32 %v864, 0.0
    %v897 = vmax.f32 %v865, 0.0
    %v898 = vmax.f32 %v866, 0.0
    %v899 = vmax.f32 %v867, 0.0
    %v900 = vmax.f32 %v868, 0.0
    %v901 = vmax.f32 %v869, 0.0
    %v902 = vmax.f32 %v870, 0.0
    %v903 = vmax.f32 %v871, 0.0
    %v904 = vmax.f32 %v872, 0.0
    %v905 = vmax.f32 %v873, 0.0
    %v906 = vmax.f32 %v874, 0.0
    %v907 = vmax.f32 %v875, 0.0
    %v908 = vmax.f32 %v876, 0.0
    %v909 = vmax.f32 %v877, 0.0
    %v910 = vmax.f32 %v878, 0.0
    %v911 = vmax.f32 %v879, 0.0
    %v912 = vmax.f32 %v880, 0.0
    %v913 = vmax.f32 %v881, 0.0
    %v914 = vmax.f32 %v882, 0.0
    %v915 = vmax.f32 %v883, 0.0
    %v916 = vmax.f32 %v884, 0.0
    %v917 = vmax.f32 %v885, 0.0
    %v918 = vmax.f32 %v886, 0.0
    %v919 = vpack.c.bf16 %v887, %v887
    %v920 = vpack.c.bf16 %v888, %v888
    %v921 = vpack.c.bf16 %v889, %v889
    %v922 = vpack.c.bf16 %v890, %v890
    %v923 = vpack.c.bf16 %v891, %v891
    %v924 = vpack.c.bf16 %v892, %v892
    %v925 = vpack.c.bf16 %v893, %v893
    %v926 = vpack.c.bf16 %v894, %v894
    %v927 = vpack.c.bf16 %v895, %v895
    %v928 = vpack.c.bf16 %v896, %v896
    %v929 = vpack.c.bf16 %v897, %v897
    %v930 = vpack.c.bf16 %v898, %v898
    %v931 = vpack.c.bf16 %v899, %v899
    %v932 = vpack.c.bf16 %v900, %v900
    %v933 = vpack.c.bf16 %v901, %v901
    %v934 = vpack.c.bf16 %v902, %v902
    %v935 = vpack.c.bf16 %v903, %v903
    %v936 = vpack.c.bf16 %v904, %v904
    %v937 = vpack.c.bf16 %v905, %v905
    %v938 = vpack.c.bf16 %v906, %v906
    %v939 = vpack.c.bf16 %v907, %v907
    %v940 = vpack.c.bf16 %v908, %v908
    %v941 = vpack.c.bf16 %v909, %v909
    %v942 = vpack.c.bf16 %v910, %v910
    %v943 = vpack.c.bf16 %v911, %v911
    %v944 = vpack.c.bf16 %v912, %v912
    %v945 = vpack.c.bf16 %v913, %v913
    %v946 = vpack.c.bf16 %v914, %v914
    %v947 = vpack.c.bf16 %v915, %v915
    %v948 = vpack.c.bf16 %v916, %v916
    %v949 = vpack.c.bf16 %v917, %v917
    %v950 = vpack.c.bf16 %v918, %v918
    %951 = vst [vmem:[%s4] sm:$0xf] %v919
    %952 = vst [vmem:[%s4 + $0x4] sm:$0xf] %v920
    %953 = vst [vmem:[%s4 + $0x8] sm:$0xf] %v921
    %954 = vst [vmem:[%s4 + $0xc] sm:$0xf] %v922
    %955 = vst [vmem:[%s4 + $0x10] sm:$0xf] %v923
    %956 = vst [vmem:[%s4 + $0x14] sm:$0xf] %v924
    %957 = vst [vmem:[%s4 + $0x18] sm:$0xf] %v925
    %958 = vst [vmem:[%s4 + $0x1c] sm:$0xf] %v926
    %959 = vst [vmem:[%s4 + $0x20] sm:$0xf] %v927
    %960 = vst [vmem:[%s4 + $0x24] sm:$0xf] %v928
    %961 = vst [vmem:[%s4 + $0x28] sm:$0xf] %v929
    %962 = vst [vmem:[%s4 + $0x2c] sm:$0xf] %v930
    %963 = vst [vmem:[%s4 + $0x30] sm:$0xf] %v931
    %964 = vst [vmem:[%s4 + $0x34] sm:$0xf] %v932
    %965 = vst [vmem:[%s4 + $0x38] sm:$0xf] %v933
    %966 = vst [vmem:[%s4 + $0x3c] sm:$0xf] %v934
    %967 = vst [vmem:[%s4 + $0x40] sm:$0xf] %v935
    %968 = vst [vmem:[%s4 + $0x44] sm:$0xf] %v936
    %969 = vst [vmem:[%s4 + $0x48] sm:$0xf] %v937
    %970 = vst [vmem:[%s4 + $0x4c] sm:$0xf] %v938
    %971 = vst [vmem:[%s4 + $0x50] sm:$0xf] %v939
    %972 = vst [vmem:[%s4 + $0x54] sm:$0xf] %v940
    %973 = vst [vmem:[%s4 + $0x58] sm:$0xf] %v941
    %974 = vst [vmem:[%s4 + $0x5c] sm:$0xf] %v942
    %975 = vst [vmem:[%s4 + $0x60] sm:$0xf] %v943
    %976 = vst [vmem:[%s4 + $0x64] sm:$0xf] %v944
    %977 = vst [vmem:[%s4 + $0x68] sm:$0xf] %v945
    %978 = vst [vmem:[%s4 + $0x6c] sm:$0xf] %v946
    %979 = vst [vmem:[%s4 + $0x70] sm:$0xf] %v947
    %980 = vst [vmem:[%s4 + $0x74] sm:$0xf] %v948
    %981 = vst [vmem:[%s4 + $0x78] sm:$0xf] %v949
    %982 = vst [vmem:[%s4 + $0x7c] sm:$0xf] %v950
  $region25: #{gcn_forward.2} parent=0 // pred_fallthru
    _
  // Predicated region
  $region26: #{gcn_forward.2} parent=0 // pred_check
    _
  $region27: #{gcn_forward.2} parent=0 // pred_check_branch
    %984 = sbr.rel (0) target = $region29
  $region28: #{gcn_forward.2} parent=0 // pred_region
    _
  $region29: #{gcn_forward.2} parent=0 // pred_fallthru
    _
  // Predicated region
  $region30: #{gcn_forward.2} parent=0 // pred_check
    _
  $region31: #{gcn_forward.2} parent=0 // pred_check_branch
    %986 = sbr.rel (0) target = $region33
  $region32: #{gcn_forward.2} parent=0 // pred_region
    _
  $region33: #{gcn_forward.2} parent=0 // pred_fallthru
    _

</llo_original>
